<compile_context>
chip_gen: v7x
topology: tpu7x:2x2x1
jax: 0.10.0
libtpu: 0.0.40
codegen_flags: <defaults>
</compile_context>

<pallas_src>
import functools

import jax
import jax.numpy as jnp
from jax.experimental import pallas as pl
from jax.experimental.pallas import tpu as pltpu


def _cdiv(a, b):
    return -(-a // b)


def _eas_layer_kernel(emb_ref, w1_ref, b1_ref, w2_ref, b2_ref, out_ref, *,
                      compute_dtype):
    # Blocks carry NB instances each: (NB, G, D) / (NB, D, D) / (NB, 1, D).
    emb = emb_ref[...].astype(compute_dtype)          # (NB, G, D)
    w1 = w1_ref[...].astype(compute_dtype)            # (NB, D, D)
    w2 = w2_ref[...].astype(compute_dtype)            # (NB, D, D)
    b1 = b1_ref[...].astype(jnp.float32)               # (NB, 1, D) -> broadcast over G
    b2 = b2_ref[...].astype(jnp.float32)               # (NB, 1, D)

    # Batched matmul over the NB instances; accumulate in f32 on the MXU.
    h = jnp.einsum("ngd,nde->nge", emb, w1,
                   preferred_element_type=jnp.float32) + b1
    h = jnp.maximum(h, 0.0)                             # ReLU in f32

    out = jnp.einsum("ngd,nde->nge", h.astype(compute_dtype), w2,
                     preferred_element_type=jnp.float32) + b2
    out_ref[...] = out.astype(out_ref.dtype)


def _chip_profile():
    """Generation-aware (scoped-VMEM cap, NB-sizing budget, TensorCores/chip)."""
    kind = ""
    try:
        kind = jax.devices()[0].device_kind.lower()
    except Exception:
        pass
    vmem = None
    try:
        vmem = int(pltpu.get_tpu_info().vmem_capacity_bytes)
    except Exception:
        pass

    # v7x-like: 64 MiB VMEM per TensorCore, 2 TensorCores per chip.
    small_vmem_chip = ("7" in kind) or (vmem is not None and vmem <= (64 << 20))
    if small_vmem_chip:
        vmem_cap, budget, num_tc = 56 << 20, 40 << 20, 2
    else:
        # v5e / v6e: 128 MiB VMEM, single TensorCore.
        vmem_cap, budget, num_tc = 96 << 20, 48 << 20, 1

    # Robustness for unexpectedly small VMEM reports: shrink, never grow.
    if vmem is not None and vmem < vmem_cap + (8 << 20):
        vmem_cap = max(16 << 20, vmem - (8 << 20))
        budget = max(4 << 20, vmem_cap - (12 << 20))
    return vmem_cap, budget, num_tc


def _footprint_bytes(nb, G, D, emb_item, w_item, b_item, c_item):
    """Estimated VMEM use for one grid step.

    Double-buffered (pipelined) input/output streams plus single-buffered
    in-kernel intermediates (dtype casts, f32 h / accumulator).
    """
    io = 2 * nb * (2 * G * D * emb_item      # emb + out
                   + 2 * D * D * w_item      # W1 + W2
                   + 2 * D * b_item)         # b1 + b2
    scratch = nb * (G * D * (8 + c_item)
                    + (2 * D * D * c_item if c_item != w_item else 0))
    return io + scratch


def _choose_block_instances(N, G, D, emb_item, w_item, b_item, c_item,
                            budget_bytes, num_tc):
    per_inst = _footprint_bytes(1, G, D, emb_item, w_item, b_item, c_item)
    nb = max(1, min(N, budget_bytes // per_inst))
    if num_tc >= 2 and N > 1:
        # The instance axis is sharded across both TensorCores
        # (dimension_semantics=("parallel",)); prefer an even number of grid
        # steps so neither core gets an extra step.
        steps = _cdiv(N, nb)
        if steps % 2 == 1:
            target = steps + 1 if steps > 1 else 2
            nb = min(nb, _cdiv(N, target))
    return max(1, nb)


def eas_layer(emb, W1, b1, W2, b2, *, compute_dtype=None, block_instances=None):
    N, G, D = emb.shape
    assert W1.shape == (N, D, D) and W2.shape == (N, D, D)
    assert b1.shape == (N, 1, D) and b2.shape == (N, 1, D)

    # Default compute dtype follows the (narrower) weight dtype: streaming bf16
    # weights halves the dominant W1/W2 HBM bytes and runs the dots on the
    # bf16-native MXU; bias-add / ReLU / accumulation stay f32.
    if compute_dtype is None:
        if jnp.dtype(W1.dtype).itemsize < jnp.dtype(emb.dtype).itemsize:
            compute_dtype = W1.dtype
        else:
            compute_dtype = emb.dtype

    emb_item = jnp.dtype(emb.dtype).itemsize
    w_item = jnp.dtype(W1.dtype).itemsize
    b_item = jnp.dtype(b1.dtype).itemsize
    c_item = jnp.dtype(compute_dtype).itemsize

    vmem_cap, budget, num_tc = _chip_profile()

    if block_instances is None:
        nb = _choose_block_instances(N, G, D, emb_item, w_item, b_item, c_item,
                                     budget, num_tc)
    else:
        nb = int(block_instances)
    nb = max(1, min(nb, N))

    footprint = _footprint_bytes(nb, G, D, emb_item, w_item, b_item, c_item)
    if footprint + (4 << 20) > vmem_cap:
        raise ValueError(
            f"block_instances={nb} needs ~{footprint >> 20} MiB of VMEM which "
            f"exceeds this chip's budget (~{vmem_cap >> 20} MiB); pass a smaller "
            "block_instances.")
    vmem_limit = int(min(vmem_cap, max(32 << 20, footprint + (8 << 20))))

    # Ragged final block is allowed: out-of-bounds reads are padded and the
    # corresponding output writes are masked (computation is per-instance
    # independent, so padded garbage never contaminates real instances).
    grid = (_cdiv(N, nb),)

    bytes_accessed = sum(int(x.size) * jnp.dtype(x.dtype).itemsize
                         for x in (emb, W1, b1, W2, b2))
    bytes_accessed += N * G * D * jnp.dtype(emb.dtype).itemsize   # output
    cost = pl.CostEstimate(flops=4 * N * G * D * D,
                           transcendentals=0,
                           bytes_accessed=int(bytes_accessed))

    kernel = functools.partial(_eas_layer_kernel, compute_dtype=compute_dtype)

    return pl.pallas_call(
        kernel,
        out_shape=jax.ShapeDtypeStruct((N, G, D), emb.dtype),
        grid_spec=pltpu.PrefetchScalarGridSpec(
            num_scalar_prefetch=0,
            grid=grid,
            in_specs=[
                pl.BlockSpec((nb, G, D), lambda n: (n, 0, 0)),   # emb
                pl.BlockSpec((nb, D, D), lambda n: (n, 0, 0)),   # W1
                pl.BlockSpec((nb, 1, D), lambda n: (n, 0, 0)),   # b1
                pl.BlockSpec((nb, D, D), lambda n: (n, 0, 0)),   # W2
                pl.BlockSpec((nb, 1, D), lambda n: (n, 0, 0)),   # b2
            ],
            out_specs=pl.BlockSpec((nb, G, D), lambda n: (n, 0, 0)),
        ),
        compiler_params=pltpu.CompilerParams(
            dimension_semantics=("parallel",),
            vmem_limit_bytes=vmem_limit),
        cost_estimate=cost,
    )(emb, W1, b1, W2, b2)


def init_params(key, num_instances, emb_dim):
    """Deterministic parameter init mirroring EASLayerNet.__init__:
    W1, b1: xavier_uniform; W2, b2: zeros."""
    k_w1, k_b1 = jax.random.split(key)
    # xavier_uniform bounds (PyTorch fan convention for >=2D tensors):
    # W1 [N, D, D]: fan_in = D*D, fan_out = N*D
    bound_w1 = jnp.sqrt(6.0 / (emb_dim * emb_dim + num_instances * emb_dim))
    # b1 [N, 1, D]: fan_in = 1*D, fan_out = N*D
    bound_b1 = jnp.sqrt(6.0 / (emb_dim + num_instances * emb_dim))
    W1 = jax.random.uniform(k_w1, (num_instances, emb_dim, emb_dim),
                            jnp.float32, -bound_w1, bound_w1)
    b1 = jax.random.uniform(k_b1, (num_instances, 1, emb_dim),
                            jnp.float32, -bound_b1, bound_b1)
    W2 = jnp.zeros((num_instances, emb_dim, emb_dim), jnp.float32)
    b2 = jnp.zeros((num_instances, 1, emb_dim), jnp.float32)
    return W1, b1, W2, b2


def reference(emb, W1, b1, W2, b2):
    h = jnp.maximum(jnp.einsum("ngd,nde->nge", emb, W1) + b1, 0.0)
    return jnp.einsum("ngd,nde->nge", h, W2) + b2


if __name__ == "__main__":
    # D=128 is the typical rl4co embedding size and keeps the lane axis dense
    # (full 128-lane vregs, unmasked stores).
    num_instances, group_num, emb_dim = 4, 8, 128

    key = jax.random.PRNGKey(0)
    k_emb, k_params = jax.random.split(key)
    emb = jax.random.normal(k_emb, (num_instances, group_num, emb_dim), jnp.float32)
    W1, b1, W2, b2 = init_params(k_params, num_instances, emb_dim)

    # Make W2/b2 nonzero so the test actually exercises the second matmul path.
    W2 = W2 + 0.01 * jax.random.normal(jax.random.PRNGKey(1), W2.shape, jnp.float32)
    b2 = b2 + 0.01

    ref = reference(emb, W1, b1, W2, b2)

    # Primary path: bf16 weight streaming (halves dominant W1/W2 HBM bytes).
    out_bf16 = jax.block_until_ready(
        eas_layer(emb, W1.astype(jnp.bfloat16), b1,
                  W2.astype(jnp.bfloat16), b2))
    assert out_bf16.shape == (num_instances, group_num, emb_dim)
    assert float(jnp.max(jnp.abs(out_bf16 - ref))) < 5e-2, "bf16 mismatch vs reference"

    # f32 path (tight tolerance vs reference).
    out_f32 = jax.block_until_ready(eas_layer(emb, W1, b1, W2, b2))
    assert jnp.allclose(out_f32, ref, atol=1e-4, rtol=1e-4), "f32 mismatch vs reference"

    # Ragged-grid path: N not a multiple of the block size (masked final block).
    N2 = 5
    emb2 = jax.random.normal(jax.random.PRNGKey(2), (N2, group_num, emb_dim), jnp.float32)
    W1b, b1b, W2b, b2b = init_params(jax.random.PRNGKey(3), N2, emb_dim)
    W2b = W2b + 0.01 * jax.random.normal(jax.random.PRNGKey(4), W2b.shape, jnp.float32)
    b2b = b2b + 0.01
    ref2 = reference(emb2, W1b, b1b, W2b, b2b)
    out2 = jax.block_until_ready(
        eas_layer(emb2, W1b, b1b, W2b, b2b, block_instances=2))
    assert jnp.allclose(out2, ref2, atol=1e-4, rtol=1e-4), "ragged-grid mismatch"

    print("KERNEL_OK")
</pallas_src>

<mosaic_0001>
module attributes {stable_mosaic.version = 11 : i64} {
  func.func @_eas_layer_kernel(%arg0: i32, %arg1: memref<4x8x128xf32, #tpu.memory_space<vmem>>, %arg2: memref<4x128x128xbf16, #tpu.memory_space<vmem>>, %arg3: memref<4x1x128xf32, #tpu.memory_space<vmem>>, %arg4: memref<4x128x128xbf16, #tpu.memory_space<vmem>>, %arg5: memref<4x1x128xf32, #tpu.memory_space<vmem>>, %arg6: memref<4x8x128xf32, #tpu.memory_space<vmem>>) attributes {dimension_semantics = [#tpu.dimension_semantics<parallel>], iteration_bounds = array<i64: 1>, scalar_prefetch = 0 : i64, scratch_operands = 0 : i64, tpu.core_type = #tpu.core_type<tc>, window_params = [{transform_indices = @transform_0, window_bounds = array<i64: 4, 8, 128>}, {transform_indices = @transform_1, window_bounds = array<i64: 4, 128, 128>}, {transform_indices = @transform_2, window_bounds = array<i64: 4, 1, 128>}, {transform_indices = @transform_3, window_bounds = array<i64: 4, 128, 128>}, {transform_indices = @transform_4, window_bounds = array<i64: 4, 1, 128>}, {transform_indices = @transform_5, window_bounds = array<i64: 4, 8, 128>}]} {
    %c0 = arith.constant 0 : index
    %c0_0 = arith.constant 0 : index
    %c0_1 = arith.constant 0 : index
    %0 = vector.load %arg1[%c0, %c0_0, %c0_1] : memref<4x8x128xf32, #tpu.memory_space<vmem>>, vector<4x8x128xf32>
    %1 = arith.truncf %0 : vector<4x8x128xf32> to vector<4x8x128xbf16>
    %c0_2 = arith.constant 0 : index
    %c0_3 = arith.constant 0 : index
    %c0_4 = arith.constant 0 : index
    %2 = vector.load %arg2[%c0_2, %c0_3, %c0_4] : memref<4x128x128xbf16, #tpu.memory_space<vmem>>, vector<4x128x128xbf16>
    %c0_5 = arith.constant 0 : index
    %c0_6 = arith.constant 0 : index
    %c0_7 = arith.constant 0 : index
    %3 = vector.load %arg4[%c0_5, %c0_6, %c0_7] : memref<4x128x128xbf16, #tpu.memory_space<vmem>>, vector<4x128x128xbf16>
    %c0_8 = arith.constant 0 : index
    %c0_9 = arith.constant 0 : index
    %c0_10 = arith.constant 0 : index
    %4 = vector.load %arg3[%c0_8, %c0_9, %c0_10] : memref<4x1x128xf32, #tpu.memory_space<vmem>>, vector<4x1x128xf32>
    %c0_11 = arith.constant 0 : index
    %c0_12 = arith.constant 0 : index
    %c0_13 = arith.constant 0 : index
    %5 = vector.load %arg5[%c0_11, %c0_12, %c0_13] : memref<4x1x128xf32, #tpu.memory_space<vmem>>, vector<4x1x128xf32>
    "tpu.trace_start"() <{level = 10 : i32, message = "ngd,nde->nge"}> : () -> ()
    %cst = arith.constant dense<0.000000e+00> : vector<4x8x128xf32>
    %6 = tpu.matmul %1, %2, %cst {dimension_numbers = #tpu.dot_dimension_numbers<[2], [1], [1], [2], [0, 0, 0, 1, 1, 2], [0], [0]>} : vector<4x8x128xbf16>, vector<4x128x128xbf16>, vector<4x8x128xf32> -> vector<4x8x128xf32>
    "tpu.trace_stop"() : () -> ()
    %7 = vector.broadcast %4 : vector<4x1x128xf32> to vector<4x8x128xf32>
    %8 = arith.addf %6, %7 : vector<4x8x128xf32>
    %cst_14 = arith.constant 0.000000e+00 : f32
    %9 = vector.broadcast %cst_14 : f32 to vector<4x8x128xf32>
    %10 = arith.maximumf %8, %9 : vector<4x8x128xf32>
    %11 = arith.truncf %10 : vector<4x8x128xf32> to vector<4x8x128xbf16>
    "tpu.trace_start"() <{level = 10 : i32, message = "ngd,nde->nge"}> : () -> ()
    %cst_15 = arith.constant dense<0.000000e+00> : vector<4x8x128xf32>
    %12 = tpu.matmul %11, %3, %cst_15 {dimension_numbers = #tpu.dot_dimension_numbers<[2], [1], [1], [2], [0, 0, 0, 1, 1, 2], [0], [0]>} : vector<4x8x128xbf16>, vector<4x128x128xbf16>, vector<4x8x128xf32> -> vector<4x8x128xf32>
    "tpu.trace_stop"() : () -> ()
    %13 = vector.broadcast %5 : vector<4x1x128xf32> to vector<4x8x128xf32>
    %14 = arith.addf %12, %13 : vector<4x8x128xf32>
    %c0_16 = arith.constant 0 : index
    %c0_17 = arith.constant 0 : index
    %c0_18 = arith.constant 0 : index
    %15 = vector.load %arg6[%c0_16, %c0_17, %c0_18] : memref<4x8x128xf32, #tpu.memory_space<vmem>>, vector<4x8x128xf32>
    tpu.vector_store %arg6[%c0_16, %c0_17, %c0_18], %14 {strides = array<i32>} : memref<4x8x128xf32, #tpu.memory_space<vmem>>, vector<4x8x128xf32>,
    return
  }
  func.func @transform_0(%arg0: i32) -> (i32, i32, i32) {
    %c0_i32 = arith.constant 0 : i32
    %c0_i32_0 = arith.constant 0 : i32
    %c0_i32_1 = arith.constant 0 : i32
    return %arg0, %c0_i32, %c0_i32_0 : i32, i32, i32
  }
  func.func @transform_1(%arg0: i32) -> (i32, i32, i32) {
    %c0_i32 = arith.constant 0 : i32
    %c0_i32_0 = arith.constant 0 : i32
    %c0_i32_1 = arith.constant 0 : i32
    return %arg0, %c0_i32, %c0_i32_0 : i32, i32, i32
  }
  func.func @transform_2(%arg0: i32) -> (i32, i32, i32) {
    %c0_i32 = arith.constant 0 : i32
    %c0_i32_0 = arith.constant 0 : i32
    %c0_i32_1 = arith.constant 0 : i32
    return %arg0, %c0_i32, %c0_i32_0 : i32, i32, i32
  }
  func.func @transform_3(%arg0: i32) -> (i32, i32, i32) {
    %c0_i32 = arith.constant 0 : i32
    %c0_i32_0 = arith.constant 0 : i32
    %c0_i32_1 = arith.constant 0 : i32
    return %arg0, %c0_i32, %c0_i32_0 : i32, i32, i32
  }
  func.func @transform_4(%arg0: i32) -> (i32, i32, i32) {
    %c0_i32 = arith.constant 0 : i32
    %c0_i32_0 = arith.constant 0 : i32
    %c0_i32_1 = arith.constant 0 : i32
    return %arg0, %c0_i32, %c0_i32_0 : i32, i32, i32
  }
  func.func @transform_5(%arg0: i32) -> (i32, i32, i32) {
    %c0_i32 = arith.constant 0 : i32
    %c0_i32_0 = arith.constant 0 : i32
    %c0_i32_1 = arith.constant 0 : i32
    return %arg0, %c0_i32, %c0_i32_0 : i32, i32, i32
  }
}

</mosaic_0001>

<llo_original>
// kernel: tpu_custom_call.1
$region0: #{tpu_custom_call.1}
  #allocation0 [shape = 'u32[]', space=smem, size = 0x4, offset = 0x4, fixed_abs, tag = 'smem constant byte address 0x4 - core index']
  #allocation1 [shape = 'u32[144,128]{1,0:T(1,128)}', space=vmem, size = 0x12000, scoped, tag = 'internal scratch']
  %s0 = inlined_call_operand.hbm [shape: f32[4,8,128], index: 0, kind: input, shape index: {}]
  %s1 = inlined_call_operand.hbm [shape: bf16[4,128,128], index: 1, kind: input, shape index: {}]
  %s2 = inlined_call_operand.vmem [shape: f32[4,1,128], index: 2, kind: input, shape index: {}]
  %s3 = inlined_call_operand.hbm [shape: bf16[4,128,128], index: 3, kind: input, shape index: {}]
  %s4 = inlined_call_operand.vmem [shape: f32[4,1,128], index: 4, kind: input, shape index: {}]
  %s5 = inlined_call_operand.hbm [shape: f32[4,8,128], index: 5, kind: output, shape index: {}]
  %s6 = sld [smem:[#allocation0]]
  $region42: #{tpu_custom_call.1} parent=0
    _
  %s8 = ssub.s32 1, %s6
  %s9 = scalar_select 0, %s8, %s6
  $region1: #{tpu_custom_call.1} parent=0
    #allocation2 [shape = 'u8[16384]{0}', space=vmem, size = 0x4000, scoped, tag = 'input window, operand 0, single buffered']
    #allocation3 [shape = 's32[1]{0}', space=sflag, size = 0x4, scoped, tag = 'scoped memory for tpu_custom_call.1']
    #allocation4 [shape = 's32[1]{0}', space=sflag, size = 0x4, scoped, tag = 'scoped memory for tpu_custom_call.1']
    #allocation5 [shape = 'u8[131072]{0}', space=vmem, size = 0x20000, scoped, tag = 'input window, operand 1, single buffered']
    #allocation6 [shape = 's32[1]{0}', space=sflag, size = 0x4, scoped, tag = 'scoped memory for tpu_custom_call.1']
    #allocation7 [shape = 'u8[131072]{0}', space=vmem, size = 0x20000, scoped, tag = 'input window, operand 3, single buffered']
    #allocation8 [shape = 'u8[16384]{0}', space=vmem, size = 0x4000, scoped, tag = 'output window, operand 0, single buffered']
    %10 = vsyncpa [#allocation3], 0
    %11 = vsyncpa [#allocation6], 0
    %12 = vsyncpa [#allocation4], 0
    // Predicated region
    $region2: #{tpu_custom_call.1} parent=1 // pred_check
      _
    $region3: #{tpu_custom_call.1} parent=1 // pred_check_branch
      %14 = sbr.rel (0) target = $region5
    $region4: #{tpu_custom_call.1} parent=1 // pred_region
      %s16 = ssub.s32 512, 512
      %17 = vsyncadd [#allocation3], %s16
      %s18 = sshll.u32 [#allocation2], 4
      %s19 = int_to_ptr.vmem [resolvable:$true] %s18
      %24 = dma.hbm_to_vmem [thread:$0]  %s0, 512, %s19, [#allocation3], 128, 128, 8
    $region5: #{tpu_custom_call.1} parent=1 // pred_fallthru
      _
    // Predicated region
    $region6: #{tpu_custom_call.1} parent=1 // pred_check
      _
    $region7: #{tpu_custom_call.1} parent=1 // pred_check_branch
      %26 = sbr.rel (0) target = $region9
    $region8: #{tpu_custom_call.1} parent=1 // pred_region
      %s28 = ssub.s32 4096, 4096
      %29 = vsyncadd [#allocation6], %s28
      %s30 = sshll.u32 [#allocation5], 4
      %s31 = int_to_ptr.vmem [resolvable:$true] %s30
      %36 = dma.hbm_to_vmem [thread:$0]  %s1, 4096, %s31, [#allocation6], 64, 64, 4
    $region9: #{tpu_custom_call.1} parent=1 // pred_fallthru
      _
    // Predicated region
    $region10: #{tpu_custom_call.1} parent=1 // pred_check
      _
    $region11: #{tpu_custom_call.1} parent=1 // pred_check_branch
      %38 = sbr.rel (0) target = $region13
    $region12: #{tpu_custom_call.1} parent=1 // pred_region
      _
    $region13: #{tpu_custom_call.1} parent=1 // pred_fallthru
      _
    // Predicated region
    $region14: #{tpu_custom_call.1} parent=1 // pred_check
      _
    $region15: #{tpu_custom_call.1} parent=1 // pred_check_branch
      %40 = sbr.rel (0) target = $region17
    $region16: #{tpu_custom_call.1} parent=1 // pred_region
      %s42 = ssub.s32 4096, 4096
      %43 = vsyncadd [#allocation6], %s42
      %s44 = sshll.u32 [#allocation7], 4
      %s45 = int_to_ptr.vmem [resolvable:$true] %s44
      %50 = dma.hbm_to_vmem [thread:$0]  %s3, 4096, %s45, [#allocation6], 64, 64, 4
    $region17: #{tpu_custom_call.1} parent=1 // pred_fallthru
      _
    // Predicated region
    $region18: #{tpu_custom_call.1} parent=1 // pred_check
      _
    $region19: #{tpu_custom_call.1} parent=1 // pred_check_branch
      %52 = sbr.rel (0) target = $region21
    $region20: #{tpu_custom_call.1} parent=1 // pred_region
      _
    $region21: #{tpu_custom_call.1} parent=1 // pred_fallthru
      _
    // Predicated region
    $region22: #{tpu_custom_call.1} parent=1 // pred_check
      _
    $region23: #{tpu_custom_call.1} parent=1 // pred_check_branch
      %54 = sbr.rel (0) target = $region25
    $region24: #{tpu_custom_call.1} parent=1 // pred_region
      %55 = dma.done [#allocation3], 512
    $region25: #{tpu_custom_call.1} parent=1 // pred_fallthru
      _
    // Predicated region
    $region26: #{tpu_custom_call.1} parent=1 // pred_check
      _
    $region27: #{tpu_custom_call.1} parent=1 // pred_check_branch
      %57 = sbr.rel (0) target = $region29
    $region28: #{tpu_custom_call.1} parent=1 // pred_region
      %58 = dma.done [#allocation6], 4096
    $region29: #{tpu_custom_call.1} parent=1 // pred_fallthru
      _
    // Predicated region
    $region30: #{tpu_custom_call.1} parent=1 // pred_check
      _
    $region31: #{tpu_custom_call.1} parent=1 // pred_check_branch
      %60 = sbr.rel (0) target = $region33
    $region32: #{tpu_custom_call.1} parent=1 // pred_region
      %61 = dma.done [#allocation6], 4096
    $region33: #{tpu_custom_call.1} parent=1 // pred_fallthru
      _
    %v63 = vld [vmem:[#allocation2] sm:$0xff]
    %v64 = vld [vmem:[#allocation2 + $0x8] sm:$0xff]
    %v65 = vld [vmem:[#allocation2 + $0x10] sm:$0xff]
    %v66 = vld [vmem:[#allocation2 + $0x18] sm:$0xff]
    %v67 = vpack.c.bf16 %v63, %v63
    %v68 = vpack.c.bf16 %v64, %v64
    %v69 = vpack.c.bf16 %v65, %v65
    %v70 = vpack.c.bf16 %v66, %v66
    %v71 = vld [vmem:[#allocation5] sm:$0xf]
    %v72 = vld [vmem:[#allocation5 + $0x4] sm:$0xf]
    %v73 = vld [vmem:[#allocation5 + $0x8] sm:$0xf]
    %v74 = vld [vmem:[#allocation5 + $0xc] sm:$0xf]
    %v75 = vld [vmem:[#allocation5 + $0x10] sm:$0xf]
    %v76 = vld [vmem:[#allocation5 + $0x14] sm:$0xf]
    %v77 = vld [vmem:[#allocation5 + $0x18] sm:$0xf]
    %v78 = vld [vmem:[#allocation5 + $0x1c] sm:$0xf]
    %v79 = vld [vmem:[#allocation5 + $0x20] sm:$0xf]
    %v80 = vld [vmem:[#allocation5 + $0x24] sm:$0xf]
    %v81 = vld [vmem:[#allocation5 + $0x28] sm:$0xf]
    %v82 = vld [vmem:[#allocation5 + $0x2c] sm:$0xf]
    %v83 = vld [vmem:[#allocation5 + $0x30] sm:$0xf]
    %v84 = vld [vmem:[#allocation5 + $0x34] sm:$0xf]
    %v85 = vld [vmem:[#allocation5 + $0x38] sm:$0xf]
    %v86 = vld [vmem:[#allocation5 + $0x3c] sm:$0xf]
    %v87 = vld [vmem:[#allocation5 + $0x40] sm:$0xf]
    %v88 = vld [vmem:[#allocation5 + $0x44] sm:$0xf]
    %v89 = vld [vmem:[#allocation5 + $0x48] sm:$0xf]
    %v90 = vld [vmem:[#allocation5 + $0x4c] sm:$0xf]
    %v91 = vld [vmem:[#allocation5 + $0x50] sm:$0xf]
    %v92 = vld [vmem:[#allocation5 + $0x54] sm:$0xf]
    %v93 = vld [vmem:[#allocation5 + $0x58] sm:$0xf]
    %v94 = vld [vmem:[#allocation5 + $0x5c] sm:$0xf]
    %v95 = vld [vmem:[#allocation5 + $0x60] sm:$0xf]
    %v96 = vld [vmem:[#allocation5 + $0x64] sm:$0xf]
    %v97 = vld [vmem:[#allocation5 + $0x68] sm:$0xf]
    %v98 = vld [vmem:[#allocation5 + $0x6c] sm:$0xf]
    %v99 = vld [vmem:[#allocation5 + $0x70] sm:$0xf]
    %v100 = vld [vmem:[#allocation5 + $0x74] sm:$0xf]
    %v101 = vld [vmem:[#allocation5 + $0x78] sm:$0xf]
    %v102 = vld [vmem:[#allocation5 + $0x7c] sm:$0xf]
    %v103 = vld [vmem:[#allocation5 + $0x80] sm:$0xf]
    %v104 = vld [vmem:[#allocation5 + $0x84] sm:$0xf]
    %v105 = vld [vmem:[#allocation5 + $0x88] sm:$0xf]
    %v106 = vld [vmem:[#allocation5 + $0x8c] sm:$0xf]
    %v107 = vld [vmem:[#allocation5 + $0x90] sm:$0xf]
    %v108 = vld [vmem:[#allocation5 + $0x94] sm:$0xf]
    %v109 = vld [vmem:[#allocation5 + $0x98] sm:$0xf]
    %v110 = vld [vmem:[#allocation5 + $0x9c] sm:$0xf]
    %v111 = vld [vmem:[#allocation5 + $0xa0] sm:$0xf]
    %v112 = vld [vmem:[#allocation5 + $0xa4] sm:$0xf]
    %v113 = vld [vmem:[#allocation5 + $0xa8] sm:$0xf]
    %v114 = vld [vmem:[#allocation5 + $0xac] sm:$0xf]
    %v115 = vld [vmem:[#allocation5 + $0xb0] sm:$0xf]
    %v116 = vld [vmem:[#allocation5 + $0xb4] sm:$0xf]
    %v117 = vld [vmem:[#allocation5 + $0xb8] sm:$0xf]
    %v118 = vld [vmem:[#allocation5 + $0xbc] sm:$0xf]
    %v119 = vld [vmem:[#allocation5 + $0xc0] sm:$0xf]
    %v120 = vld [vmem:[#allocation5 + $0xc4] sm:$0xf]
    %v121 = vld [vmem:[#allocation5 + $0xc8] sm:$0xf]
    %v122 = vld [vmem:[#allocation5 + $0xcc] sm:$0xf]
    %v123 = vld [vmem:[#allocation5 + $0xd0] sm:$0xf]
    %v124 = vld [vmem:[#allocation5 + $0xd4] sm:$0xf]
    %v125 = vld [vmem:[#allocation5 + $0xd8] sm:$0xf]
    %v126 = vld [vmem:[#allocation5 + $0xdc] sm:$0xf]
    %v127 = vld [vmem:[#allocation5 + $0xe0] sm:$0xf]
    %v128 = vld [vmem:[#allocation5 + $0xe4] sm:$0xf]
    %v129 = vld [vmem:[#allocation5 + $0xe8] sm:$0xf]
    %v130 = vld [vmem:[#allocation5 + $0xec] sm:$0xf]
    %v131 = vld [vmem:[#allocation5 + $0xf0] sm:$0xf]
    %v132 = vld [vmem:[#allocation5 + $0xf4] sm:$0xf]
    %v133 = vld [vmem:[#allocation5 + $0xf8] sm:$0xf]
    %v134 = vld [vmem:[#allocation5 + $0xfc] sm:$0xf]
    %v135 = vld [vmem:[#allocation7] sm:$0xf]
    %v136 = vld [vmem:[#allocation7 + $0x4] sm:$0xf]
    %v137 = vld [vmem:[#allocation7 + $0x8] sm:$0xf]
    %v138 = vld [vmem:[#allocation7 + $0xc] sm:$0xf]
    %v139 = vld [vmem:[#allocation7 + $0x10] sm:$0xf]
    %v140 = vld [vmem:[#allocation7 + $0x14] sm:$0xf]
    %v141 = vld [vmem:[#allocation7 + $0x18] sm:$0xf]
    %v142 = vld [vmem:[#allocation7 + $0x1c] sm:$0xf]
    %v143 = vld [vmem:[#allocation7 + $0x20] sm:$0xf]
    %v144 = vld [vmem:[#allocation7 + $0x24] sm:$0xf]
    %v145 = vld [vmem:[#allocation7 + $0x28] sm:$0xf]
    %v146 = vld [vmem:[#allocation7 + $0x2c] sm:$0xf]
    %v147 = vld [vmem:[#allocation7 + $0x30] sm:$0xf]
    %v148 = vld [vmem:[#allocation7 + $0x34] sm:$0xf]
    %v149 = vld [vmem:[#allocation7 + $0x38] sm:$0xf]
    %v150 = vld [vmem:[#allocation7 + $0x3c] sm:$0xf]
    %v151 = vld [vmem:[#allocation7 + $0x40] sm:$0xf]
    %v152 = vld [vmem:[#allocation7 + $0x44] sm:$0xf]
    %v153 = vld [vmem:[#allocation7 + $0x48] sm:$0xf]
    %v154 = vld [vmem:[#allocation7 + $0x4c] sm:$0xf]
    %v155 = vld [vmem:[#allocation7 + $0x50] sm:$0xf]
    %v156 = vld [vmem:[#allocation7 + $0x54] sm:$0xf]
    %v157 = vld [vmem:[#allocation7 + $0x58] sm:$0xf]
    %v158 = vld [vmem:[#allocation7 + $0x5c] sm:$0xf]
    %v159 = vld [vmem:[#allocation7 + $0x60] sm:$0xf]
    %v160 = vld [vmem:[#allocation7 + $0x64] sm:$0xf]
    %v161 = vld [vmem:[#allocation7 + $0x68] sm:$0xf]
    %v162 = vld [vmem:[#allocation7 + $0x6c] sm:$0xf]
    %v163 = vld [vmem:[#allocation7 + $0x70] sm:$0xf]
    %v164 = vld [vmem:[#allocation7 + $0x74] sm:$0xf]
    %v165 = vld [vmem:[#allocation7 + $0x78] sm:$0xf]
    %v166 = vld [vmem:[#allocation7 + $0x7c] sm:$0xf]
    %v167 = vld [vmem:[#allocation7 + $0x80] sm:$0xf]
    %v168 = vld [vmem:[#allocation7 + $0x84] sm:$0xf]
    %v169 = vld [vmem:[#allocation7 + $0x88] sm:$0xf]
    %v170 = vld [vmem:[#allocation7 + $0x8c] sm:$0xf]
    %v171 = vld [vmem:[#allocation7 + $0x90] sm:$0xf]
    %v172 = vld [vmem:[#allocation7 + $0x94] sm:$0xf]
    %v173 = vld [vmem:[#allocation7 + $0x98] sm:$0xf]
    %v174 = vld [vmem:[#allocation7 + $0x9c] sm:$0xf]
    %v175 = vld [vmem:[#allocation7 + $0xa0] sm:$0xf]
    %v176 = vld [vmem:[#allocation7 + $0xa4] sm:$0xf]
    %v177 = vld [vmem:[#allocation7 + $0xa8] sm:$0xf]
    %v178 = vld [vmem:[#allocation7 + $0xac] sm:$0xf]
    %v179 = vld [vmem:[#allocation7 + $0xb0] sm:$0xf]
    %v180 = vld [vmem:[#allocation7 + $0xb4] sm:$0xf]
    %v181 = vld [vmem:[#allocation7 + $0xb8] sm:$0xf]
    %v182 = vld [vmem:[#allocation7 + $0xbc] sm:$0xf]
    %v183 = vld [vmem:[#allocation7 + $0xc0] sm:$0xf]
    %v184 = vld [vmem:[#allocation7 + $0xc4] sm:$0xf]
    %v185 = vld [vmem:[#allocation7 + $0xc8] sm:$0xf]
    %v186 = vld [vmem:[#allocation7 + $0xcc] sm:$0xf]
    %v187 = vld [vmem:[#allocation7 + $0xd0] sm:$0xf]
    %v188 = vld [vmem:[#allocation7 + $0xd4] sm:$0xf]
    %v189 = vld [vmem:[#allocation7 + $0xd8] sm:$0xf]
    %v190 = vld [vmem:[#allocation7 + $0xdc] sm:$0xf]
    %v191 = vld [vmem:[#allocation7 + $0xe0] sm:$0xf]
    %v192 = vld [vmem:[#allocation7 + $0xe4] sm:$0xf]
    %v193 = vld [vmem:[#allocation7 + $0xe8] sm:$0xf]
    %v194 = vld [vmem:[#allocation7 + $0xec] sm:$0xf]
    %v195 = vld [vmem:[#allocation7 + $0xf0] sm:$0xf]
    %v196 = vld [vmem:[#allocation7 + $0xf4] sm:$0xf]
    %v197 = vld [vmem:[#allocation7 + $0xf8] sm:$0xf]
    %v198 = vld [vmem:[#allocation7 + $0xfc] sm:$0xf]
    %v199 = vld [vmem:[%s2] sm:$0x1]
    %v200 = vld [vmem:[%s2 + $0x1] sm:$0x1]
    %v201 = vld [vmem:[%s2 + $0x2] sm:$0x1]
    %v202 = vld [vmem:[%s2 + $0x3] sm:$0x1]
    %v203 = vld [vmem:[%s4] sm:$0x1]
    %v204 = vld [vmem:[%s4 + $0x1] sm:$0x1]
    %v205 = vld [vmem:[%s4 + $0x2] sm:$0x1]
    %v206 = vld [vmem:[%s4 + $0x3] sm:$0x1]
    %v211 = vlaneseq
    %v212 = vshrl.u32 %v211, 7
    %v213 = vsub.s32 0, %v212
    %v214 = vrot.slane %v199, %v213
    %v215 = vlaneseq
    %v216 = vshrl.u32 %v215, 7
    %v217 = vsub.s32 0, %v216
    %v218 = vrot.slane %v200, %v217
    %v219 = vlaneseq
    %v220 = vshrl.u32 %v219, 7
    %v221 = vsub.s32 0, %v220
    %v222 = vrot.slane %v201, %v221
    %v223 = vlaneseq
    %v224 = vshrl.u32 %v223, 7
    %v225 = vsub.s32 0, %v224
    %v226 = vrot.slane %v202, %v225
    %v247 = vunpack.c.l.b16 %v71
    %v248 = vunpack.c.l.b16 %v72
    %v249 = vunpack.c.l.b16 %v73
    %v250 = vunpack.c.l.b16 %v74
    %v251 = vunpack.c.l.b16 %v75
    %v252 = vunpack.c.l.b16 %v76
    %v253 = vunpack.c.l.b16 %v77
    %v254 = vunpack.c.l.b16 %v78
    %v255 = vunpack.c.l.b16 %v79
    %v256 = vunpack.c.l.b16 %v80
    %v257 = vunpack.c.l.b16 %v81
    %v258 = vunpack.c.l.b16 %v82
    %v259 = vunpack.c.l.b16 %v83
    %v260 = vunpack.c.l.b16 %v84
    %v261 = vunpack.c.l.b16 %v85
    %v262 = vunpack.c.l.b16 %v86
    %v263 = vpack.c.b16 %v248, %v247
    %v264 = vpack.c.b16 %v250, %v249
    %v265 = vpack.c.b16 %v252, %v251
    %v266 = vpack.c.b16 %v254, %v253
    %v267 = vpack.c.b16 %v256, %v255
    %v268 = vpack.c.b16 %v258, %v257
    %v269 = vpack.c.b16 %v260, %v259
    %v270 = vpack.c.b16 %v262, %v261
    %279 = vmatprep.subr.bf16.mxu0 0
    %280 = vmatpush1.bf16.msra.mxu0 %v263
    %281 = vmatprep.subr.bf16.mxu0 0
    %282 = vmatpush1.bf16.msra.mxu0 %v264
    %283 = vmatprep.subr.bf16.mxu0 0
    %284 = vmatpush1.bf16.msra.mxu0 %v265
    %285 = vmatprep.subr.bf16.mxu0 0
    %286 = vmatpush1.bf16.msra.mxu0 %v266
    %287 = vmatprep.subr.bf16.mxu0 0
    %288 = vmatpush1.bf16.msra.mxu0 %v267
    %289 = vmatprep.subr.bf16.mxu0 0
    %290 = vmatpush1.bf16.msra.mxu0 %v268
    %291 = vmatprep.subr.bf16.mxu0 0
    %292 = vmatpush1.bf16.msra.mxu0 %v269
    %293 = vmatprep.subr.bf16.mxu0 0
    %294 = vmatpush1.bf16.msra.mxu0 %v270
    %295 = vmatprep.subr.bf16.mxu0 0
    %296 = vmatpush1.bf16.msra.mxu0 0
    %297 = vmatprep.subr.bf16.mxu0 0
    %298 = vmatpush1.bf16.msra.mxu0 0
    %299 = vmatprep.subr.bf16.mxu0 0
    %300 = vmatpush1.bf16.msra.mxu0 0
    %301 = vmatprep.subr.bf16.mxu0 0
    %302 = vmatpush1.bf16.msra.mxu0 0
    %303 = vmatprep.subr.bf16.mxu0 0
    %304 = vmatpush1.bf16.msra.mxu0 0
    %305 = vmatprep.subr.bf16.mxu0 0
    %306 = vmatpush1.bf16.msra.mxu0 0
    %307 = vmatprep.subr.bf16.mxu0 0
    %308 = vmatpush1.bf16.msra.mxu0 0
    %309 = vmatprep.subr.bf16.mxu0 0
    %310 = vmatpush1.bf16.msra.mxu0 0
    %311 = vmatprep.mubr.bf16.mxu0 0
    %312 = vmatmul.mubr.bf16.gmra.mrb[0].mxu0 %v67
    %v313 = vpop.f32.mrb[0].mxu0
    %v314 = vadd.f32 %v214, %v313
    %v315 = vpop.f32.mrb[0].mxu0
    %v316 = vpop.f32.mrb[0].mxu0
    %v317 = vpop.f32.mrb[0].mxu0
    %318 = vdwg.mxu0
    %v335 = vunpack.c.l.b16 %v87
    %v336 = vunpack.c.l.b16 %v88
    %v337 = vunpack.c.l.b16 %v89
    %v338 = vunpack.c.l.b16 %v90
    %v339 = vunpack.c.l.b16 %v91
    %v340 = vunpack.c.l.b16 %v92
    %v341 = vunpack.c.l.b16 %v93
    %v342 = vunpack.c.l.b16 %v94
    %v343 = vunpack.c.l.b16 %v95
    %v344 = vunpack.c.l.b16 %v96
    %v345 = vunpack.c.l.b16 %v97
    %v346 = vunpack.c.l.b16 %v98
    %v347 = vunpack.c.l.b16 %v99
    %v348 = vunpack.c.l.b16 %v100
    %v349 = vunpack.c.l.b16 %v101
    %v350 = vunpack.c.l.b16 %v102
    %v351 = vpack.c.b16 %v336, %v335
    %v352 = vpack.c.b16 %v338, %v337
    %v353 = vpack.c.b16 %v340, %v339
    %v354 = vpack.c.b16 %v342, %v341
    %v355 = vpack.c.b16 %v344, %v343
    %v356 = vpack.c.b16 %v346, %v345
    %v357 = vpack.c.b16 %v348, %v347
    %v358 = vpack.c.b16 %v350, %v349
    %367 = vmatprep.subr.bf16.mxu0 0
    %368 = vmatpush1.bf16.msra.mxu0 %v351
    %369 = vmatprep.subr.bf16.mxu0 0
    %370 = vmatpush1.bf16.msra.mxu0 %v352
    %371 = vmatprep.subr.bf16.mxu0 0
    %372 = vmatpush1.bf16.msra.mxu0 %v353
    %373 = vmatprep.subr.bf16.mxu0 0
    %374 = vmatpush1.bf16.msra.mxu0 %v354
    %375 = vmatprep.subr.bf16.mxu0 0
    %376 = vmatpush1.bf16.msra.mxu0 %v355
    %377 = vmatprep.subr.bf16.mxu0 0
    %378 = vmatpush1.bf16.msra.mxu0 %v356
    %379 = vmatprep.subr.bf16.mxu0 0
    %380 = vmatpush1.bf16.msra.mxu0 %v357
    %381 = vmatprep.subr.bf16.mxu0 0
    %382 = vmatpush1.bf16.msra.mxu0 %v358
    %383 = vmatprep.subr.bf16.mxu0 0
    %384 = vmatpush1.bf16.msra.mxu0 0
    %385 = vmatprep.subr.bf16.mxu0 0
    %386 = vmatpush1.bf16.msra.mxu0 0
    %387 = vmatprep.subr.bf16.mxu0 0
    %388 = vmatpush1.bf16.msra.mxu0 0
    %389 = vmatprep.subr.bf16.mxu0 0
    %390 = vmatpush1.bf16.msra.mxu0 0
    %391 = vmatprep.subr.bf16.mxu0 0
    %392 = vmatpush1.bf16.msra.mxu0 0
    %393 = vmatprep.subr.bf16.mxu0 0
    %394 = vmatpush1.bf16.msra.mxu0 0
    %395 = vmatprep.subr.bf16.mxu0 0
    %396 = vmatpush1.bf16.msra.mxu0 0
    %397 = vmatprep.subr.bf16.mxu0 0
    %398 = vmatpush1.bf16.msra.mxu0 0
    %399 = vmatprep.mubr.bf16.mxu0 0
    %400 = vmatmul.mubr.bf16.gmra.mrb[0].mxu0 %v68
    %v401 = vpop.f32.mrb[0].mxu0
    %v402 = vadd.f32 %v218, %v401
    %v403 = vpop.f32.mrb[0].mxu0
    %v404 = vpop.f32.mrb[0].mxu0
    %v405 = vpop.f32.mrb[0].mxu0
    %406 = vdwg.mxu0
    %v423 = vunpack.c.l.b16 %v103
    %v424 = vunpack.c.l.b16 %v104
    %v425 = vunpack.c.l.b16 %v105
    %v426 = vunpack.c.l.b16 %v106
    %v427 = vunpack.c.l.b16 %v107
    %v428 = vunpack.c.l.b16 %v108
    %v429 = vunpack.c.l.b16 %v109
    %v430 = vunpack.c.l.b16 %v110
    %v431 = vunpack.c.l.b16 %v111
    %v432 = vunpack.c.l.b16 %v112
    %v433 = vunpack.c.l.b16 %v113
    %v434 = vunpack.c.l.b16 %v114
    %v435 = vunpack.c.l.b16 %v115
    %v436 = vunpack.c.l.b16 %v116
    %v437 = vunpack.c.l.b16 %v117
    %v438 = vunpack.c.l.b16 %v118
    %v439 = vpack.c.b16 %v424, %v423
    %v440 = vpack.c.b16 %v426, %v425
    %v441 = vpack.c.b16 %v428, %v427
    %v442 = vpack.c.b16 %v430, %v429
    %v443 = vpack.c.b16 %v432, %v431
    %v444 = vpack.c.b16 %v434, %v433
    %v445 = vpack.c.b16 %v436, %v435
    %v446 = vpack.c.b16 %v438, %v437
    %455 = vmatprep.subr.bf16.mxu0 0
    %456 = vmatpush1.bf16.msra.mxu0 %v439
    %457 = vmatprep.subr.bf16.mxu0 0
    %458 = vmatpush1.bf16.msra.mxu0 %v440
    %459 = vmatprep.subr.bf16.mxu0 0
    %460 = vmatpush1.bf16.msra.mxu0 %v441
    %461 = vmatprep.subr.bf16.mxu0 0
    %462 = vmatpush1.bf16.msra.mxu0 %v442
    %463 = vmatprep.subr.bf16.mxu0 0
    %464 = vmatpush1.bf16.msra.mxu0 %v443
    %465 = vmatprep.subr.bf16.mxu0 0
    %466 = vmatpush1.bf16.msra.mxu0 %v444
    %467 = vmatprep.subr.bf16.mxu0 0
    %468 = vmatpush1.bf16.msra.mxu0 %v445
    %469 = vmatprep.subr.bf16.mxu0 0
    %470 = vmatpush1.bf16.msra.mxu0 %v446
    %471 = vmatprep.subr.bf16.mxu0 0
    %472 = vmatpush1.bf16.msra.mxu0 0
    %473 = vmatprep.subr.bf16.mxu0 0
    %474 = vmatpush1.bf16.msra.mxu0 0
    %475 = vmatprep.subr.bf16.mxu0 0
    %476 = vmatpush1.bf16.msra.mxu0 0
    %477 = vmatprep.subr.bf16.mxu0 0
    %478 = vmatpush1.bf16.msra.mxu0 0
    %479 = vmatprep.subr.bf16.mxu0 0
    %480 = vmatpush1.bf16.msra.mxu0 0
    %481 = vmatprep.subr.bf16.mxu0 0
    %482 = vmatpush1.bf16.msra.mxu0 0
    %483 = vmatprep.subr.bf16.mxu0 0
    %484 = vmatpush1.bf16.msra.mxu0 0
    %485 = vmatprep.subr.bf16.mxu0 0
    %486 = vmatpush1.bf16.msra.mxu0 0
    %487 = vmatprep.mubr.bf16.mxu0 0
    %488 = vmatmul.mubr.bf16.gmra.mrb[0].mxu0 %v69
    %v489 = vpop.f32.mrb[0].mxu0
    %v490 = vadd.f32 %v222, %v489
    %v491 = vpop.f32.mrb[0].mxu0
    %v492 = vpop.f32.mrb[0].mxu0
    %v493 = vpop.f32.mrb[0].mxu0
    %494 = vdwg.mxu0
    %v511 = vunpack.c.l.b16 %v119
    %v512 = vunpack.c.l.b16 %v120
    %v513 = vunpack.c.l.b16 %v121
    %v514 = vunpack.c.l.b16 %v122
    %v515 = vunpack.c.l.b16 %v123
    %v516 = vunpack.c.l.b16 %v124
    %v517 = vunpack.c.l.b16 %v125
    %v518 = vunpack.c.l.b16 %v126
    %v519 = vunpack.c.l.b16 %v127
    %v520 = vunpack.c.l.b16 %v128
    %v521 = vunpack.c.l.b16 %v129
    %v522 = vunpack.c.l.b16 %v130
    %v523 = vunpack.c.l.b16 %v131
    %v524 = vunpack.c.l.b16 %v132
    %v525 = vunpack.c.l.b16 %v133
    %v526 = vunpack.c.l.b16 %v134
    %v527 = vpack.c.b16 %v512, %v511
    %v528 = vpack.c.b16 %v514, %v513
    %v529 = vpack.c.b16 %v516, %v515
    %v530 = vpack.c.b16 %v518, %v517
    %v531 = vpack.c.b16 %v520, %v519
    %v532 = vpack.c.b16 %v522, %v521
    %v533 = vpack.c.b16 %v524, %v523
    %v534 = vpack.c.b16 %v526, %v525
    %543 = vmatprep.subr.bf16.mxu0 0
    %544 = vmatpush1.bf16.msra.mxu0 %v527
    %545 = vmatprep.subr.bf16.mxu0 0
    %546 = vmatpush1.bf16.msra.mxu0 %v528
    %547 = vmatprep.subr.bf16.mxu0 0
    %548 = vmatpush1.bf16.msra.mxu0 %v529
    %549 = vmatprep.subr.bf16.mxu0 0
    %550 = vmatpush1.bf16.msra.mxu0 %v530
    %551 = vmatprep.subr.bf16.mxu0 0
    %552 = vmatpush1.bf16.msra.mxu0 %v531
    %553 = vmatprep.subr.bf16.mxu0 0
    %554 = vmatpush1.bf16.msra.mxu0 %v532
    %555 = vmatprep.subr.bf16.mxu0 0
    %556 = vmatpush1.bf16.msra.mxu0 %v533
    %557 = vmatprep.subr.bf16.mxu0 0
    %558 = vmatpush1.bf16.msra.mxu0 %v534
    %559 = vmatprep.subr.bf16.mxu0 0
    %560 = vmatpush1.bf16.msra.mxu0 0
    %561 = vmatprep.subr.bf16.mxu0 0
    %562 = vmatpush1.bf16.msra.mxu0 0
    %563 = vmatprep.subr.bf16.mxu0 0
    %564 = vmatpush1.bf16.msra.mxu0 0
    %565 = vmatprep.subr.bf16.mxu0 0
    %566 = vmatpush1.bf16.msra.mxu0 0
    %567 = vmatprep.subr.bf16.mxu0 0
    %568 = vmatpush1.bf16.msra.mxu0 0
    %569 = vmatprep.subr.bf16.mxu0 0
    %570 = vmatpush1.bf16.msra.mxu0 0
    %571 = vmatprep.subr.bf16.mxu0 0
    %572 = vmatpush1.bf16.msra.mxu0 0
    %573 = vmatprep.subr.bf16.mxu0 0
    %574 = vmatpush1.bf16.msra.mxu0 0
    %575 = vmatprep.mubr.bf16.mxu0 0
    %576 = vmatmul.mubr.bf16.gmra.mrb[0].mxu0 %v70
    %v577 = vpop.f32.mrb[0].mxu0
    %v578 = vadd.f32 %v226, %v577
    %v579 = vpop.f32.mrb[0].mxu0
    %v580 = vpop.f32.mrb[0].mxu0
    %v581 = vpop.f32.mrb[0].mxu0
    %582 = vdwg.mxu0
    %v583 = vmax.f32 %v314, 0.0
    %v584 = vmax.f32 %v402, 0.0
    %v585 = vmax.f32 %v490, 0.0
    %v586 = vmax.f32 %v578, 0.0
    %v587 = vpack.c.bf16 %v583, %v583
    %v588 = vpack.c.bf16 %v584, %v584
    %v589 = vpack.c.bf16 %v585, %v585
    %v590 = vpack.c.bf16 %v586, %v586
    %v595 = vlaneseq
    %v596 = vshrl.u32 %v595, 7
    %v597 = vsub.s32 0, %v596
    %v598 = vrot.slane %v203, %v597
    %v599 = vlaneseq
    %v600 = vshrl.u32 %v599, 7
    %v601 = vsub.s32 0, %v600
    %v602 = vrot.slane %v204, %v601
    %v603 = vlaneseq
    %v604 = vshrl.u32 %v603, 7
    %v605 = vsub.s32 0, %v604
    %v606 = vrot.slane %v205, %v605
    %v607 = vlaneseq
    %v608 = vshrl.u32 %v607, 7
    %v609 = vsub.s32 0, %v608
    %v610 = vrot.slane %v206, %v609
    %v631 = vunpack.c.l.b16 %v135
    %v632 = vunpack.c.l.b16 %v136
    %v633 = vunpack.c.l.b16 %v137
    %v634 = vunpack.c.l.b16 %v138
    %v635 = vunpack.c.l.b16 %v139
    %v636 = vunpack.c.l.b16 %v140
    %v637 = vunpack.c.l.b16 %v141
    %v638 = vunpack.c.l.b16 %v142
    %v639 = vunpack.c.l.b16 %v143
    %v640 = vunpack.c.l.b16 %v144
    %v641 = vunpack.c.l.b16 %v145
    %v642 = vunpack.c.l.b16 %v146
    %v643 = vunpack.c.l.b16 %v147
    %v644 = vunpack.c.l.b16 %v148
    %v645 = vunpack.c.l.b16 %v149
    %v646 = vunpack.c.l.b16 %v150
    %v647 = vpack.c.b16 %v632, %v631
    %v648 = vpack.c.b16 %v634, %v633
    %v649 = vpack.c.b16 %v636, %v635
    %v650 = vpack.c.b16 %v638, %v637
    %v651 = vpack.c.b16 %v640, %v639
    %v652 = vpack.c.b16 %v642, %v641
    %v653 = vpack.c.b16 %v644, %v643
    %v654 = vpack.c.b16 %v646, %v645
    %663 = vmatprep.subr.bf16.mxu0 0
    %664 = vmatpush1.bf16.msra.mxu0 %v647
    %665 = vmatprep.subr.bf16.mxu0 0
    %666 = vmatpush1.bf16.msra.mxu0 %v648
    %667 = vmatprep.subr.bf16.mxu0 0
    %668 = vmatpush1.bf16.msra.mxu0 %v649
    %669 = vmatprep.subr.bf16.mxu0 0
    %670 = vmatpush1.bf16.msra.mxu0 %v650
    %671 = vmatprep.subr.bf16.mxu0 0
    %672 = vmatpush1.bf16.msra.mxu0 %v651
    %673 = vmatprep.subr.bf16.mxu0 0
    %674 = vmatpush1.bf16.msra.mxu0 %v652
    %675 = vmatprep.subr.bf16.mxu0 0
    %676 = vmatpush1.bf16.msra.mxu0 %v653
    %677 = vmatprep.subr.bf16.mxu0 0
    %678 = vmatpush1.bf16.msra.mxu0 %v654
    %679 = vmatprep.subr.bf16.mxu0 0
    %680 = vmatpush1.bf16.msra.mxu0 0
    %681 = vmatprep.subr.bf16.mxu0 0
    %682 = vmatpush1.bf16.msra.mxu0 0
    %683 = vmatprep.subr.bf16.mxu0 0
    %684 = vmatpush1.bf16.msra.mxu0 0
    %685 = vmatprep.subr.bf16.mxu0 0
    %686 = vmatpush1.bf16.msra.mxu0 0
    %687 = vmatprep.subr.bf16.mxu0 0
    %688 = vmatpush1.bf16.msra.mxu0 0
    %689 = vmatprep.subr.bf16.mxu0 0
    %690 = vmatpush1.bf16.msra.mxu0 0
    %691 = vmatprep.subr.bf16.mxu0 0
    %692 = vmatpush1.bf16.msra.mxu0 0
    %693 = vmatprep.subr.bf16.mxu0 0
    %694 = vmatpush1.bf16.msra.mxu0 0
    %695 = vmatprep.mubr.bf16.mxu0 0
    %696 = vmatmul.mubr.bf16.gmra.mrb[0].mxu0 %v587
    %v697 = vpop.f32.mrb[0].mxu0
    %v698 = vadd.f32 %v598, %v697
    %v699 = vpop.f32.mrb[0].mxu0
    %v700 = vpop.f32.mrb[0].mxu0
    %v701 = vpop.f32.mrb[0].mxu0
    %702 = vdwg.mxu0
    %v719 = vunpack.c.l.b16 %v151
    %v720 = vunpack.c.l.b16 %v152
    %v721 = vunpack.c.l.b16 %v153
    %v722 = vunpack.c.l.b16 %v154
    %v723 = vunpack.c.l.b16 %v155
    %v724 = vunpack.c.l.b16 %v156
    %v725 = vunpack.c.l.b16 %v157
    %v726 = vunpack.c.l.b16 %v158
    %v727 = vunpack.c.l.b16 %v159
    %v728 = vunpack.c.l.b16 %v160
    %v729 = vunpack.c.l.b16 %v161
    %v730 = vunpack.c.l.b16 %v162
    %v731 = vunpack.c.l.b16 %v163
    %v732 = vunpack.c.l.b16 %v164
    %v733 = vunpack.c.l.b16 %v165
    %v734 = vunpack.c.l.b16 %v166
    %v735 = vpack.c.b16 %v720, %v719
    %v736 = vpack.c.b16 %v722, %v721
    %v737 = vpack.c.b16 %v724, %v723
    %v738 = vpack.c.b16 %v726, %v725
    %v739 = vpack.c.b16 %v728, %v727
    %v740 = vpack.c.b16 %v730, %v729
    %v741 = vpack.c.b16 %v732, %v731
    %v742 = vpack.c.b16 %v734, %v733
    %751 = vmatprep.subr.bf16.mxu0 0
    %752 = vmatpush1.bf16.msra.mxu0 %v735
    %753 = vmatprep.subr.bf16.mxu0 0
    %754 = vmatpush1.bf16.msra.mxu0 %v736
    %755 = vmatprep.subr.bf16.mxu0 0
    %756 = vmatpush1.bf16.msra.mxu0 %v737
    %757 = vmatprep.subr.bf16.mxu0 0
    %758 = vmatpush1.bf16.msra.mxu0 %v738
    %759 = vmatprep.subr.bf16.mxu0 0
    %760 = vmatpush1.bf16.msra.mxu0 %v739
    %761 = vmatprep.subr.bf16.mxu0 0
    %762 = vmatpush1.bf16.msra.mxu0 %v740
    %763 = vmatprep.subr.bf16.mxu0 0
    %764 = vmatpush1.bf16.msra.mxu0 %v741
    %765 = vmatprep.subr.bf16.mxu0 0
    %766 = vmatpush1.bf16.msra.mxu0 %v742
    %767 = vmatprep.subr.bf16.mxu0 0
    %768 = vmatpush1.bf16.msra.mxu0 0
    %769 = vmatprep.subr.bf16.mxu0 0
    %770 = vmatpush1.bf16.msra.mxu0 0
    %771 = vmatprep.subr.bf16.mxu0 0
    %772 = vmatpush1.bf16.msra.mxu0 0
    %773 = vmatprep.subr.bf16.mxu0 0
    %774 = vmatpush1.bf16.msra.mxu0 0
    %775 = vmatprep.subr.bf16.mxu0 0
    %776 = vmatpush1.bf16.msra.mxu0 0
    %777 = vmatprep.subr.bf16.mxu0 0
    %778 = vmatpush1.bf16.msra.mxu0 0
    %779 = vmatprep.subr.bf16.mxu0 0
    %780 = vmatpush1.bf16.msra.mxu0 0
    %781 = vmatprep.subr.bf16.mxu0 0
    %782 = vmatpush1.bf16.msra.mxu0 0
    %783 = vmatprep.mubr.bf16.mxu0 0
    %784 = vmatmul.mubr.bf16.gmra.mrb[0].mxu0 %v588
    %v785 = vpop.f32.mrb[0].mxu0
    %v786 = vadd.f32 %v602, %v785
    %v787 = vpop.f32.mrb[0].mxu0
    %v788 = vpop.f32.mrb[0].mxu0
    %v789 = vpop.f32.mrb[0].mxu0
    %790 = vdwg.mxu0
    %v807 = vunpack.c.l.b16 %v167
    %v808 = vunpack.c.l.b16 %v168
    %v809 = vunpack.c.l.b16 %v169
    %v810 = vunpack.c.l.b16 %v170
    %v811 = vunpack.c.l.b16 %v171
    %v812 = vunpack.c.l.b16 %v172
    %v813 = vunpack.c.l.b16 %v173
    %v814 = vunpack.c.l.b16 %v174
    %v815 = vunpack.c.l.b16 %v175
    %v816 = vunpack.c.l.b16 %v176
    %v817 = vunpack.c.l.b16 %v177
    %v818 = vunpack.c.l.b16 %v178
    %v819 = vunpack.c.l.b16 %v179
    %v820 = vunpack.c.l.b16 %v180
    %v821 = vunpack.c.l.b16 %v181
    %v822 = vunpack.c.l.b16 %v182
    %v823 = vpack.c.b16 %v808, %v807
    %v824 = vpack.c.b16 %v810, %v809
    %v825 = vpack.c.b16 %v812, %v811
    %v826 = vpack.c.b16 %v814, %v813
    %v827 = vpack.c.b16 %v816, %v815
    %v828 = vpack.c.b16 %v818, %v817
    %v829 = vpack.c.b16 %v820, %v819
    %v830 = vpack.c.b16 %v822, %v821
    %839 = vmatprep.subr.bf16.mxu0 0
    %840 = vmatpush1.bf16.msra.mxu0 %v823
    %841 = vmatprep.subr.bf16.mxu0 0
    %842 = vmatpush1.bf16.msra.mxu0 %v824
    %843 = vmatprep.subr.bf16.mxu0 0
    %844 = vmatpush1.bf16.msra.mxu0 %v825
    %845 = vmatprep.subr.bf16.mxu0 0
    %846 = vmatpush1.bf16.msra.mxu0 %v826
    %847 = vmatprep.subr.bf16.mxu0 0
    %848 = vmatpush1.bf16.msra.mxu0 %v827
    %849 = vmatprep.subr.bf16.mxu0 0
    %850 = vmatpush1.bf16.msra.mxu0 %v828
    %851 = vmatprep.subr.bf16.mxu0 0
    %852 = vmatpush1.bf16.msra.mxu0 %v829
    %853 = vmatprep.subr.bf16.mxu0 0
    %854 = vmatpush1.bf16.msra.mxu0 %v830
    %855 = vmatprep.subr.bf16.mxu0 0
    %856 = vmatpush1.bf16.msra.mxu0 0
    %857 = vmatprep.subr.bf16.mxu0 0
    %858 = vmatpush1.bf16.msra.mxu0 0
    %859 = vmatprep.subr.bf16.mxu0 0
    %860 = vmatpush1.bf16.msra.mxu0 0
    %861 = vmatprep.subr.bf16.mxu0 0
    %862 = vmatpush1.bf16.msra.mxu0 0
    %863 = vmatprep.subr.bf16.mxu0 0
    %864 = vmatpush1.bf16.msra.mxu0 0
    %865 = vmatprep.subr.bf16.mxu0 0
    %866 = vmatpush1.bf16.msra.mxu0 0
    %867 = vmatprep.subr.bf16.mxu0 0
    %868 = vmatpush1.bf16.msra.mxu0 0
    %869 = vmatprep.subr.bf16.mxu0 0
    %870 = vmatpush1.bf16.msra.mxu0 0
    %871 = vmatprep.mubr.bf16.mxu0 0
    %872 = vmatmul.mubr.bf16.gmra.mrb[0].mxu0 %v589
    %v873 = vpop.f32.mrb[0].mxu0
    %v874 = vadd.f32 %v606, %v873
    %v875 = vpop.f32.mrb[0].mxu0
    %v876 = vpop.f32.mrb[0].mxu0
    %v877 = vpop.f32.mrb[0].mxu0
    %878 = vdwg.mxu0
    %v895 = vunpack.c.l.b16 %v183
    %v896 = vunpack.c.l.b16 %v184
    %v897 = vunpack.c.l.b16 %v185
    %v898 = vunpack.c.l.b16 %v186
    %v899 = vunpack.c.l.b16 %v187
    %v900 = vunpack.c.l.b16 %v188
    %v901 = vunpack.c.l.b16 %v189
    %v902 = vunpack.c.l.b16 %v190
    %v903 = vunpack.c.l.b16 %v191
    %v904 = vunpack.c.l.b16 %v192
    %v905 = vunpack.c.l.b16 %v193
    %v906 = vunpack.c.l.b16 %v194
    %v907 = vunpack.c.l.b16 %v195
    %v908 = vunpack.c.l.b16 %v196
    %v909 = vunpack.c.l.b16 %v197
    %v910 = vunpack.c.l.b16 %v198
    %v911 = vpack.c.b16 %v896, %v895
    %v912 = vpack.c.b16 %v898, %v897
    %v913 = vpack.c.b16 %v900, %v899
    %v914 = vpack.c.b16 %v902, %v901
    %v915 = vpack.c.b16 %v904, %v903
    %v916 = vpack.c.b16 %v906, %v905
    %v917 = vpack.c.b16 %v908, %v907
    %v918 = vpack.c.b16 %v910, %v909
    %927 = vmatprep.subr.bf16.mxu0 0
    %928 = vmatpush1.bf16.msra.mxu0 %v911
    %929 = vmatprep.subr.bf16.mxu0 0
    %930 = vmatpush1.bf16.msra.mxu0 %v912
    %931 = vmatprep.subr.bf16.mxu0 0
    %932 = vmatpush1.bf16.msra.mxu0 %v913
    %933 = vmatprep.subr.bf16.mxu0 0
    %934 = vmatpush1.bf16.msra.mxu0 %v914
    %935 = vmatprep.subr.bf16.mxu0 0
    %936 = vmatpush1.bf16.msra.mxu0 %v915
    %937 = vmatprep.subr.bf16.mxu0 0
    %938 = vmatpush1.bf16.msra.mxu0 %v916
    %939 = vmatprep.subr.bf16.mxu0 0
    %940 = vmatpush1.bf16.msra.mxu0 %v917
    %941 = vmatprep.subr.bf16.mxu0 0
    %942 = vmatpush1.bf16.msra.mxu0 %v918
    %943 = vmatprep.subr.bf16.mxu0 0
    %944 = vmatpush1.bf16.msra.mxu0 0
    %945 = vmatprep.subr.bf16.mxu0 0
    %946 = vmatpush1.bf16.msra.mxu0 0
    %947 = vmatprep.subr.bf16.mxu0 0
    %948 = vmatpush1.bf16.msra.mxu0 0
    %949 = vmatprep.subr.bf16.mxu0 0
    %950 = vmatpush1.bf16.msra.mxu0 0
    %951 = vmatprep.subr.bf16.mxu0 0
    %952 = vmatpush1.bf16.msra.mxu0 0
    %953 = vmatprep.subr.bf16.mxu0 0
    %954 = vmatpush1.bf16.msra.mxu0 0
    %955 = vmatprep.subr.bf16.mxu0 0
    %956 = vmatpush1.bf16.msra.mxu0 0
    %957 = vmatprep.subr.bf16.mxu0 0
    %958 = vmatpush1.bf16.msra.mxu0 0
    %959 = vmatprep.mubr.bf16.mxu0 0
    %960 = vmatmul.mubr.bf16.gmra.mrb[0].mxu0 %v590
    %v961 = vpop.f32.mrb[0].mxu0
    %v962 = vadd.f32 %v610, %v961
    %v963 = vpop.f32.mrb[0].mxu0
    %v964 = vpop.f32.mrb[0].mxu0
    %v965 = vpop.f32.mrb[0].mxu0
    %966 = vdwg.mxu0
    %967 = vst [vmem:[#allocation8] sm:$0xff] %v698
    %968 = vst [vmem:[#allocation8 + $0x8] sm:$0xff] %v786
    %969 = vst [vmem:[#allocation8 + $0x10] sm:$0xff] %v874
    %970 = vst [vmem:[#allocation8 + $0x18] sm:$0xff] %v962
    // Predicated region
    $region34: #{tpu_custom_call.1} parent=1 // pred_check
      _
    $region35: #{tpu_custom_call.1} parent=1 // pred_check_branch
      %972 = sbr.rel (0) target = $region37
    $region36: #{tpu_custom_call.1} parent=1 // pred_region
      %s974 = ssub.s32 512, 512
      %975 = vsyncadd [#allocation4], %s974
      %s976 = sshll.u32 [#allocation8], 4
      %s977 = int_to_ptr.vmem [resolvable:$true] %s976
      %982 = dma.vmem_to_hbm [thread:$0]  %s977, 512, %s5, [#allocation4], 128, 128, 8
    $region37: #{tpu_custom_call.1} parent=1 // pred_fallthru
      _
    // Predicated region
    $region38: #{tpu_custom_call.1} parent=1 // pred_check
      _
    $region39: #{tpu_custom_call.1} parent=1 // pred_check_branch
      %984 = sbr.rel (0) target = $region41
    $region40: #{tpu_custom_call.1} parent=1 // pred_region
      %985 = dma.done [#allocation4], 512
    $region41: #{tpu_custom_call.1} parent=1 // pred_fallthru
      _
    %986 = vsyncpa [#allocation3], 1
    %987 = vsyncpa [#allocation6], 1
    %988 = vsyncpa [#allocation4], 1

</llo_original>
